<compile_context>
chip_gen: v6e
topology: v6e:2x2x1
jax: 0.10.0
libtpu: 0.0.40
codegen_flags: <defaults>
</compile_context>

<pallas_src>
import functools
import math

import jax
import jax.numpy as jnp
from jax.experimental import pallas as pl
from jax.experimental.pallas import tpu as pltpu


def _attention_kernel(*refs, has_mask, project_keys, n_val, compute_dtype):
    """One grid step: TB batch elements, full Q/K/depth extents.

    refs layout (inputs then outputs, as passed by pallas_call):
      w_ref (d, d), [vlen_ref (TB, Q, 1) iff has_mask],
      q_ref (TB, Q, d), k_ref (TB, K, d),
      n_val value refs (TB, K, Dv_i), then n_val output refs (TB, Q, Dv_i).
    """
    idx = 0
    w_ref = refs[idx]; idx += 1
    vlen_ref = None
    if has_mask:
        vlen_ref = refs[idx]; idx += 1
    q_ref = refs[idx]; idx += 1
    k_ref = refs[idx]; idx += 1
    val_refs = refs[idx: idx + n_val]
    out_refs = refs[idx + n_val: idx + 2 * n_val]

    TB, Q, d = q_ref.shape
    K = k_ref.shape[1]

    q = q_ref[...]                       # (TB, Q, d) compute_dtype (bf16 default)
    k = k_ref[...]                       # (TB, K, d)
    w = w_ref[...]                       # (d, d)
    inv_sqrt_d = jnp.float32(1.0 / math.sqrt(d))

    # nn.Linear(d, d, bias=False): scores = (q @ W.T) @ k.T == q @ (k @ W).T.
    # Project whichever of {queries, keys} has more rows (better MXU row fill);
    # both contractions use W's native layout (no in-kernel transpose).  The
    # 1/sqrt(d) score scale is folded into the projected tensor.
    if project_keys:
        proj = jax.lax.dot_general(k.reshape(TB * K, d), w,
                                   (((1,), (0,)), ((), ())),     # k @ W
                                   preferred_element_type=jnp.float32)
        kw = (proj * inv_sqrt_d).astype(compute_dtype).reshape(TB, K, d)
        scores = jnp.einsum("bqd,bkd->bqk", q, kw,
                            preferred_element_type=jnp.float32)  # (TB, Q, K)
    else:
        proj = jax.lax.dot_general(q.reshape(TB * Q, d), w,
                                   (((1,), (1,)), ((), ())),     # q @ W.T
                                   preferred_element_type=jnp.float32)
        qw = (proj * inv_sqrt_d).astype(compute_dtype).reshape(TB, Q, d)
        scores = jnp.einsum("bqd,bkd->bqk", qw, k,
                            preferred_element_type=jnp.float32)  # (TB, Q, K)

    if has_mask:
        # sequence_mask: key positions >= valid_len set to -1e6 (matches d2l;
        # scores with magnitude near 1e6 would leak — harmless for real inputs).
        vl = vlen_ref[...]                                       # (TB, Q, 1)
        col_ids = jax.lax.broadcasted_iota(jnp.int32, (TB, Q, K), 2)
        scores = jnp.where(col_ids < vl, scores, jnp.float32(-1000000.0))

    # Softmax over the key axis; the approx reciprocal runs on the EUP slot.
    m = jnp.max(scores, axis=-1, keepdims=True)
    e = jnp.exp(scores - m)
    attn = e * pl.reciprocal(jnp.sum(e, axis=-1, keepdims=True), approx=True)
    attn = attn.astype(compute_dtype)    # bf16 MXU operand for the AV matmuls

    for v_ref, o_ref in zip(val_refs, out_refs):
        out = jnp.einsum("bqk,bkv->bqv", attn, v_ref[...],
                         preferred_element_type=jnp.float32)
        o_ref[...] = out.astype(o_ref.dtype)


def _vmem_capacity_bytes():
    try:
        cap = getattr(pltpu.get_tpu_info(), "vmem_capacity_bytes", None)
        if cap:
            return int(cap)
    except Exception:
        pass
    return 64 << 20          # conservative fallback (v7x per-TC VMEM)


def _per_step_vmem_bytes(tb, Q, K, d, val_dims, out_dims, comp_bytes, out_bytes,
                         has_mask):
    b = d * d * comp_bytes                                   # W (grid-invariant)
    b += tb * Q * d * comp_bytes + tb * K * d * comp_bytes   # queries + keys
    for dv in val_dims:
        b += tb * K * dv * comp_bytes                        # value tiles
    for dv in out_dims:
        b += tb * Q * dv * out_bytes                         # output tiles
    if has_mask:
        b += tb * Q * 4                                      # valid lens (int32)
    return 2 * b                                             # double-buffered


def _choose_block_b(B, Q, K, d, val_dims, out_dims, comp_bytes, out_bytes,
                    has_mask, vmem_budget):
    """Batch elements per grid step.

    Targets 512–1024 projection rows per step (amortizes ~0.35us/step overhead,
    fills MXU rows), guarantees >=2 grid steps when B >= 2 (v7x has 2 TCs and
    ("parallel",) only shards with >=2 steps), and clamps so the double-buffered
    per-step tiles fit the generation-dependent VMEM budget.
    """
    rows = max(max(Q, K), 1)             # rows of the shared-W projection matmul
    tb = max(1024 // rows, 1)
    if B >= 2:
        tb = min(tb, (B + 1) // 2)       # >=2 grid steps -> megacore sharding
    tb = max(min(tb, B), 1)
    while tb > 1 and _per_step_vmem_bytes(tb, Q, K, d, val_dims, out_dims,
                                          comp_bytes, out_bytes,
                                          has_mask) > vmem_budget:
        tb //= 2
    return tb


def dot_product_attention(w, queries, keys, values, labels, valid_lens=None,
                          *, block_b=None, compute_dtype=jnp.bfloat16):
    """Pallas implementation of DotProductAttention.forward.

    Returns (attn @ values, attn @ labels) with shapes (B, Q, Dv) / (B, Q, Dl)
    in the dtype of `queries`.  MXU operands are cast to `compute_dtype`
    (bf16 by default) and all matmuls accumulate in f32.
    valid_lens: None, (B,) or (B, Q).
    """
    B, Q, d = queries.shape
    _, K, _ = keys.shape
    Dv, Dl = values.shape[-1], labels.shape[-1]
    Dvl = Dv + Dl
    out_dtype = queries.dtype
    comp_bytes = jnp.dtype(compute_dtype).itemsize
    out_bytes = jnp.dtype(out_dtype).itemsize
    has_mask = valid_lens is not None

    w_c = w.astype(compute_dtype)
    q_c = queries.astype(compute_dtype)
    k_c = keys.astype(compute_dtype)

    # [values | labels] are combined into one lane-dense (128-multiple) block —
    # single unmasked store — only when the padding overhead is small (<=25%);
    # otherwise V and L stay separate & unpadded to avoid inflating HBM traffic.
    Dp = ((Dvl + 127) // 128) * 128
    use_concat = (Dp - Dvl) * 4 <= Dvl
    if use_concat:
        vlab = jnp.concatenate([values, labels], axis=-1).astype(compute_dtype)
        if Dp != Dvl:
            vlab = jnp.pad(vlab, ((0, 0), (0, 0), (0, Dp - Dvl)))
        val_list = [vlab]
        out_dims = [Dp]
    else:
        val_list = [values.astype(compute_dtype), labels.astype(compute_dtype)]
        out_dims = [Dv, Dl]
    val_dims = [v.shape[-1] for v in val_list]

    vlen = None
    if has_mask:
        vl = valid_lens.astype(jnp.int32)
        if vl.ndim == 1:
            vl = jnp.broadcast_to(vl[:, None], (B, Q))
        vlen = vl.reshape(B, Q)[:, :, None]              # (B, Q, 1)

    # ---- batch tiling (grid is a serial loop per TC; TB elements per step). --
    vmem_cap = _vmem_capacity_bytes()
    if block_b is None:
        tb = _choose_block_b(B, Q, K, d, val_dims, out_dims, comp_bytes,
                             out_bytes, has_mask, vmem_budget=vmem_cap // 2)
    else:
        tb = max(min(block_b, B), 1)
    step_bytes = _per_step_vmem_bytes(tb, Q, K, d, val_dims, out_dims,
                                      comp_bytes, out_bytes, has_mask)
    vmem_limit = min(int(vmem_cap * 0.9), max(32 << 20, step_bytes + (8 << 20)))

    grid_b = -(-B // tb)
    B_pad = grid_b * tb
    if B_pad != B:
        pad3 = ((0, B_pad - B), (0, 0), (0, 0))
        q_c = jnp.pad(q_c, pad3)
        k_c = jnp.pad(k_c, pad3)
        val_list = [jnp.pad(v, pad3) for v in val_list]
        if has_mask:
            vlen = jnp.pad(vlen, pad3, constant_values=K)

    in_specs = [pl.BlockSpec((d, d), lambda b: (0, 0))]       # W (shared)
    args = [w_c]
    if has_mask:
        in_specs.append(pl.BlockSpec((tb, Q, 1), lambda b: (b, 0, 0)))
        args.append(vlen)
    in_specs += [pl.BlockSpec((tb, Q, d), lambda b: (b, 0, 0)),
                 pl.BlockSpec((tb, K, d), lambda b: (b, 0, 0))]
    args += [q_c, k_c]
    for dv in val_dims:
        in_specs.append(pl.BlockSpec((tb, K, dv), lambda b: (b, 0, 0)))
    args += val_list

    out_specs = tuple(pl.BlockSpec((tb, Q, dv), lambda b: (b, 0, 0))
                      for dv in out_dims)
    out_shape = tuple(jax.ShapeDtypeStruct((B_pad, Q, dv), out_dtype)
                      for dv in out_dims)

    kernel = functools.partial(_attention_kernel,
                               has_mask=has_mask,
                               project_keys=(K > Q),
                               n_val=len(val_list),
                               compute_dtype=compute_dtype)

    grid_spec = pltpu.PrefetchScalarGridSpec(
        num_scalar_prefetch=0,
        grid=(grid_b,),
        in_specs=in_specs,
        out_specs=out_specs,
    )

    outs = pl.pallas_call(
        kernel,
        out_shape=out_shape,
        grid_spec=grid_spec,
        compiler_params=pltpu.CompilerParams(
            dimension_semantics=("parallel",),      # megacore / v7x 2-TC sharding
            vmem_limit_bytes=vmem_limit),
    )(*args)

    if use_concat:
        out = outs[0][:B]
        return out[..., :Dv], out[..., Dv:Dvl]
    return outs[0][:B], outs[1][:B]


def _reference(w, queries, keys, values, labels, valid_lens):
    """Pure-JAX (f32) reference mirroring the PyTorch forward."""
    d = queries.shape[-1]
    qw = jnp.einsum("bqd,ed->bqe", queries, w)                  # Linear (no bias)
    scores = jnp.einsum("bqd,bkd->bqk", qw, keys) / math.sqrt(d)
    if valid_lens is not None:
        vl = valid_lens if valid_lens.ndim == 2 else valid_lens[:, None]
        col = jnp.arange(scores.shape[-1])[None, None, :]
        scores = jnp.where(col < vl[:, :, None], scores, -1000000.0)
    attn = jax.nn.softmax(scores, axis=-1)
    return (jnp.einsum("bqk,bkv->bqv", attn, values),
            jnp.einsum("bqk,bkv->bqv", attn, labels))


def _round_bf16(x):
    return x.astype(jnp.bfloat16).astype(jnp.float32)


if __name__ == "__main__":
    key = jax.random.PRNGKey(0)

    # ---- case 1: small Dv+Dl (separate V/L path), 1-D valid_lens, Q == K. ----
    B, Q, K, d, Dv, Dl = 2, 8, 8, 32, 16, 4
    k0, k1, k2, k3, k4, k5, k6, k7, k8, k9 = jax.random.split(key, 10)
    bound = 1.0 / math.sqrt(d)
    w = jax.random.uniform(k0, (d, d), jnp.float32, minval=-bound, maxval=bound)
    queries = jax.random.normal(k1, (B, Q, d), jnp.float32)
    keys = jax.random.normal(k2, (B, K, d), jnp.float32)
    values = jax.random.normal(k3, (B, K, Dv), jnp.float32)
    labels = jax.random.normal(k4, (B, K, Dl), jnp.float32)
    valid_lens = jnp.array([5, 8], dtype=jnp.int32)

    out_v, out_l = dot_product_attention(w, queries, keys, values, labels,
                                         valid_lens)
    jax.block_until_ready((out_v, out_l))
    # Reference on bf16-rounded inputs (kernel computes with bf16 MXU operands).
    ref_v, ref_l = _reference(_round_bf16(w), _round_bf16(queries),
                              _round_bf16(keys), _round_bf16(values),
                              _round_bf16(labels), valid_lens)
    assert out_v.shape == (B, Q, Dv) and out_l.shape == (B, Q, Dl)
    assert jnp.allclose(out_v, ref_v, atol=3e-2, rtol=3e-2)
    assert jnp.allclose(out_l, ref_l, atol=3e-2, rtol=3e-2)

    # ---- case 1b: no mask (mask path compiled out). ----
    out_v2, out_l2 = dot_product_attention(w, queries, keys, values, labels,
                                           None)
    jax.block_until_ready((out_v2, out_l2))
    ref_v2, ref_l2 = _reference(_round_bf16(w), _round_bf16(queries),
                                _round_bf16(keys), _round_bf16(values),
                                _round_bf16(labels), None)
    assert jnp.allclose(out_v2, ref_v2, atol=3e-2, rtol=3e-2)
    assert jnp.allclose(out_l2, ref_l2, atol=3e-2, rtol=3e-2)

    # ---- case 2: Dv+Dl == 128 (lane-dense concat path), K > Q (project keys),
    #      2-D valid_lens, multi-step grid with batch padding logic exercised. --
    B2, Q2, K2, d2, Dv2, Dl2 = 4, 8, 16, 32, 96, 32
    w2 = jax.random.uniform(k5, (d2, d2), jnp.float32,
                            minval=-1.0 / math.sqrt(d2),
                            maxval=1.0 / math.sqrt(d2))
    queries2 = jax.random.normal(k6, (B2, Q2, d2), jnp.float32)
    keys2 = jax.random.normal(k7, (B2, K2, d2), jnp.float32)
    values2 = jax.random.normal(k8, (B2, K2, Dv2), jnp.float32)
    labels2 = jax.random.normal(k9, (B2, K2, Dl2), jnp.float32)
    valid_lens2 = jax.random.randint(jax.random.PRNGKey(1), (B2, Q2), 1, K2 + 1)

    out_v3, out_l3 = dot_product_attention(w2, queries2, keys2, values2,
                                           labels2, valid_lens2)
    jax.block_until_ready((out_v3, out_l3))
    ref_v3, ref_l3 = _reference(_round_bf16(w2), _round_bf16(queries2),
                                _round_bf16(keys2), _round_bf16(values2),
                                _round_bf16(labels2), valid_lens2)
    assert out_v3.shape == (B2, Q2, Dv2) and out_l3.shape == (B2, Q2, Dl2)
    assert jnp.allclose(out_v3, ref_v3, atol=3e-2, rtol=3e-2)
    assert jnp.allclose(out_l3, ref_l3, atol=3e-2, rtol=3e-2)

    print("KERNEL_OK")
</pallas_src>

<mosaic_0001>
module attributes {stable_mosaic.version = 11 : i64} {
  func.func @_attention_kernel(%arg0: i32, %arg1: memref<32x32xbf16, #tpu.memory_space<vmem>>, %arg2: memref<1x8x1xi32, #tpu.memory_space<vmem>>, %arg3: memref<1x8x32xbf16, #tpu.memory_space<vmem>>, %arg4: memref<1x8x32xbf16, #tpu.memory_space<vmem>>, %arg5: memref<1x8x16xbf16, #tpu.memory_space<vmem>>, %arg6: memref<1x8x4xbf16, #tpu.memory_space<vmem>>, %arg7: memref<1x8x16xf32, #tpu.memory_space<vmem>>, %arg8: memref<1x8x4xf32, #tpu.memory_space<vmem>>) attributes {dimension_semantics = [#tpu.dimension_semantics<parallel>], iteration_bounds = array<i64: 2>, scalar_prefetch = 0 : i64, scratch_operands = 0 : i64, tpu.core_type = #tpu.core_type<tc>, window_params = [{pipeline_mode = #tpu.pipeline_mode<synchronous>, transform_indices = @transform_0, window_bounds = array<i64: 32, 32>}, {transform_indices = @transform_1, window_bounds = array<i64: 1, 8, 1>}, {transform_indices = @transform_2, window_bounds = array<i64: 1, 8, 32>}, {transform_indices = @transform_3, window_bounds = array<i64: 1, 8, 32>}, {transform_indices = @transform_4, window_bounds = array<i64: 1, 8, 16>}, {transform_indices = @transform_5, window_bounds = array<i64: 1, 8, 4>}, {transform_indices = @transform_6, window_bounds = array<i64: 1, 8, 16>}, {transform_indices = @transform_7, window_bounds = array<i64: 1, 8, 4>}]} {
    %c0 = arith.constant 0 : index
    %c0_0 = arith.constant 0 : index
    %c0_1 = arith.constant 0 : index
    %0 = vector.load %arg3[%c0, %c0_0, %c0_1] : memref<1x8x32xbf16, #tpu.memory_space<vmem>>, vector<1x8x32xbf16>
    %c0_2 = arith.constant 0 : index
    %c0_3 = arith.constant 0 : index
    %c0_4 = arith.constant 0 : index
    %1 = vector.load %arg4[%c0_2, %c0_3, %c0_4] : memref<1x8x32xbf16, #tpu.memory_space<vmem>>, vector<1x8x32xbf16>
    %c0_5 = arith.constant 0 : index
    %c0_6 = arith.constant 0 : index
    %2 = vector.load %arg1[%c0_5, %c0_6] : memref<32x32xbf16, #tpu.memory_space<vmem>>, vector<32x32xbf16>
    %3 = vector.shape_cast %0 : vector<1x8x32xbf16> to vector<8x32xbf16>
    %cst = arith.constant dense<0.000000e+00> : vector<8x32xf32>
    %4 = tpu.matmul %3, %2, %cst {dimension_numbers = #tpu.dot_dimension_numbers<[1], [1], [0], [0], [0, 0, 1, 0], [], []>} : vector<8x32xbf16>, vector<32x32xbf16>, vector<8x32xf32> -> vector<8x32xf32>
    %cst_7 = arith.constant 0.176776692 : f32
    %5 = vector.broadcast %cst_7 : f32 to vector<8x32xf32>
    %6 = arith.mulf %4, %5 : vector<8x32xf32>
    %7 = arith.truncf %6 : vector<8x32xf32> to vector<8x32xbf16>
    %8 = vector.shape_cast %7 : vector<8x32xbf16> to vector<1x8x32xbf16>
    "tpu.trace_start"() <{level = 10 : i32, message = "bqd,bkd->bqk"}> : () -> ()
    %cst_8 = arith.constant dense<0.000000e+00> : vector<1x8x8xf32>
    %9 = tpu.matmul %8, %1, %cst_8 {dimension_numbers = #tpu.dot_dimension_numbers<[2], [2], [1], [1], [0, 0, 0, 1, 1, 1], [0], [0]>} : vector<1x8x32xbf16>, vector<1x8x32xbf16>, vector<1x8x8xf32> -> vector<1x8x8xf32>
    "tpu.trace_stop"() : () -> ()
    %c0_9 = arith.constant 0 : index
    %c0_10 = arith.constant 0 : index
    %c0_11 = arith.constant 0 : index
    %10 = vector.load %arg2[%c0_9, %c0_10, %c0_11] : memref<1x8x1xi32, #tpu.memory_space<vmem>>, vector<1x8x1xi32>
    %11 = tpu.iota {dimensions = array<i32: 2>} : vector<1x8x8xi32>
    %12 = vector.broadcast %10 : vector<1x8x1xi32> to vector<1x8x8xi32>
    %13 = arith.cmpi slt, %11, %12 : vector<1x8x8xi32>
    %cst_12 = arith.constant -1.000000e+06 : f32
    %14 = vector.broadcast %cst_12 : f32 to vector<1x8x8xf32>
    %15 = arith.select %13, %9, %14 : vector<1x8x8xi1>, vector<1x8x8xf32>
    %cst_13 = arith.constant dense<0xFF800000> : vector<1x8xf32>
    %16 = vector.multi_reduction <maximumf>, %15, %cst_13 [2] : vector<1x8x8xf32> to vector<1x8xf32>
    %17 = vector.shape_cast %16 : vector<1x8xf32> to vector<1x8x1xf32>
    %18 = vector.broadcast %17 : vector<1x8x1xf32> to vector<1x8x8xf32>
    %19 = arith.subf %15, %18 : vector<1x8x8xf32>
    %20 = math.exp %19 : vector<1x8x8xf32>
    %cst_14 = arith.constant dense<0.000000e+00> : vector<1x8xf32>
    %21 = vector.multi_reduction <add>, %20, %cst_14 [2] : vector<1x8x8xf32> to vector<1x8xf32>
    %22 = vector.shape_cast %21 : vector<1x8xf32> to vector<1x8x1xf32>
    %23 = tpu.reciprocal %22 {approx = true} : vector<1x8x1xf32> -> vector<1x8x1xf32>
    %24 = vector.broadcast %23 : vector<1x8x1xf32> to vector<1x8x8xf32>
    %25 = arith.mulf %20, %24 : vector<1x8x8xf32>
    %26 = arith.truncf %25 : vector<1x8x8xf32> to vector<1x8x8xbf16>
    %c0_15 = arith.constant 0 : index
    %c0_16 = arith.constant 0 : index
    %c0_17 = arith.constant 0 : index
    %27 = vector.load %arg5[%c0_15, %c0_16, %c0_17] : memref<1x8x16xbf16, #tpu.memory_space<vmem>>, vector<1x8x16xbf16>
    "tpu.trace_start"() <{level = 10 : i32, message = "bqk,bkv->bqv"}> : () -> ()
    %cst_18 = arith.constant dense<0.000000e+00> : vector<1x8x16xf32>
    %28 = tpu.matmul %26, %27, %cst_18 {dimension_numbers = #tpu.dot_dimension_numbers<[2], [1], [1], [2], [0, 0, 0, 1, 1, 2], [0], [0]>} : vector<1x8x8xbf16>, vector<1x8x16xbf16>, vector<1x8x16xf32> -> vector<1x8x16xf32>
    "tpu.trace_stop"() : () -> ()
    %c0_19 = arith.constant 0 : index
    %c0_20 = arith.constant 0 : index
    %c0_21 = arith.constant 0 : index
    %29 = vector.load %arg7[%c0_19, %c0_20, %c0_21] : memref<1x8x16xf32, #tpu.memory_space<vmem>>, vector<1x8x16xf32>
    tpu.vector_store %arg7[%c0_19, %c0_20, %c0_21], %28 {strides = array<i32>} : memref<1x8x16xf32, #tpu.memory_space<vmem>>, vector<1x8x16xf32>,
    %c0_22 = arith.constant 0 : index
    %c0_23 = arith.constant 0 : index
    %c0_24 = arith.constant 0 : index
    %30 = vector.load %arg6[%c0_22, %c0_23, %c0_24] : memref<1x8x4xbf16, #tpu.memory_space<vmem>>, vector<1x8x4xbf16>
    "tpu.trace_start"() <{level = 10 : i32, message = "bqk,bkv->bqv"}> : () -> ()
    %cst_25 = arith.constant dense<0.000000e+00> : vector<1x8x4xf32>
    %31 = tpu.matmul %26, %30, %cst_25 {dimension_numbers = #tpu.dot_dimension_numbers<[2], [1], [1], [2], [0, 0, 0, 1, 1, 2], [0], [0]>} : vector<1x8x8xbf16>, vector<1x8x4xbf16>, vector<1x8x4xf32> -> vector<1x8x4xf32>
    "tpu.trace_stop"() : () -> ()
    %c0_26 = arith.constant 0 : index
    %c0_27 = arith.constant 0 : index
    %c0_28 = arith.constant 0 : index
    %32 = vector.load %arg8[%c0_26, %c0_27, %c0_28] : memref<1x8x4xf32, #tpu.memory_space<vmem>>, vector<1x8x4xf32>
    tpu.vector_store %arg8[%c0_26, %c0_27, %c0_28], %31 {strides = array<i32>} : memref<1x8x4xf32, #tpu.memory_space<vmem>>, vector<1x8x4xf32>,
    return
  }
  func.func @transform_0(%arg0: i32) -> (i32, i32) {
    %c0_i32 = arith.constant 0 : i32
    %c0_i32_0 = arith.constant 0 : i32
    %c0_i32_1 = arith.constant 0 : i32
    return %c0_i32, %c0_i32_0 : i32, i32
  }
  func.func @transform_1(%arg0: i32) -> (i32, i32, i32) {
    %c0_i32 = arith.constant 0 : i32
    %c0_i32_0 = arith.constant 0 : i32
    %c0_i32_1 = arith.constant 0 : i32
    return %arg0, %c0_i32, %c0_i32_0 : i32, i32, i32
  }
  func.func @transform_2(%arg0: i32) -> (i32, i32, i32) {
    %c0_i32 = arith.constant 0 : i32
    %c0_i32_0 = arith.constant 0 : i32
    %c0_i32_1 = arith.constant 0 : i32
    return %arg0, %c0_i32, %c0_i32_0 : i32, i32, i32
  }
  func.func @transform_3(%arg0: i32) -> (i32, i32, i32) {
    %c0_i32 = arith.constant 0 : i32
    %c0_i32_0 = arith.constant 0 : i32
    %c0_i32_1 = arith.constant 0 : i32
    return %arg0, %c0_i32, %c0_i32_0 : i32, i32, i32
  }
  func.func @transform_4(%arg0: i32) -> (i32, i32, i32) {
    %c0_i32 = arith.constant 0 : i32
    %c0_i32_0 = arith.constant 0 : i32
    %c0_i32_1 = arith.constant 0 : i32
    return %arg0, %c0_i32, %c0_i32_0 : i32, i32, i32
  }
  func.func @transform_5(%arg0: i32) -> (i32, i32, i32) {
    %c0_i32 = arith.constant 0 : i32
    %c0_i32_0 = arith.constant 0 : i32
    %c0_i32_1 = arith.constant 0 : i32
    return %arg0, %c0_i32, %c0_i32_0 : i32, i32, i32
  }
  func.func @transform_6(%arg0: i32) -> (i32, i32, i32) {
    %c0_i32 = arith.constant 0 : i32
    %c0_i32_0 = arith.constant 0 : i32
    %c0_i32_1 = arith.constant 0 : i32
    return %arg0, %c0_i32, %c0_i32_0 : i32, i32, i32
  }
  func.func @transform_7(%arg0: i32) -> (i32, i32, i32) {
    %c0_i32 = arith.constant 0 : i32
    %c0_i32_0 = arith.constant 0 : i32
    %c0_i32_1 = arith.constant 0 : i32
    return %arg0, %c0_i32, %c0_i32_0 : i32, i32, i32
  }
}

</mosaic_0001>

<llo_original>
// kernel: tpu_custom_call.1
$region0: #{tpu_custom_call.1}
  #allocation0 [shape = 'u32[]', space=smem, size = 0x4, offset = 0x4, fixed_abs, tag = 'smem constant byte address 0x4 - core index']
  #allocation1 [shape = 'u32[144,128]{1,0:T(1,128)}', space=vmem, size = 0x12000, scoped, tag = 'internal scratch']
  %s0 = inlined_call_operand.vmem [shape: bf16[32,32], index: 0, kind: input, shape index: {}]
  %s1 = inlined_call_operand.vmem [shape: s32[2,8,1], index: 1, kind: input, shape index: {}]
  %s2 = inlined_call_operand.vmem [shape: bf16[2,8,32], index: 2, kind: input, shape index: {}]
  %s3 = inlined_call_operand.vmem [shape: bf16[2,8,32], index: 3, kind: input, shape index: {}]
  %s4 = inlined_call_operand.hbm [shape: bf16[2,8,16], index: 4, kind: input, shape index: {}]
  %s5 = inlined_call_operand.vmem [shape: bf16[2,8,4], index: 5, kind: input, shape index: {}]
  %s6 = inlined_call_operand.hbm [shape: f32[2,8,16], index: 6, kind: output, shape index: {0}]
  %s7 = inlined_call_operand.vmem [shape: f32[2,8,4], index: 7, kind: output, shape index: {1}]
  %8 = xla_tuple %s6, %s7
  %s9 = sld [smem:[#allocation0]]
  $region69: #{tpu_custom_call.1} parent=0
    _
  %s11 = ssub.s32 1, %s9
  %s12 = scalar_select 0, %s11, %s9
  $region1: #{tpu_custom_call.1} parent=0
    #allocation2 [shape = 'u8[4096]{0}', space=vmem, size = 0x1000, scoped, tag = 'input window, operand 4']
    #allocation3 [shape = 's32[2]{0}', space=sflag, size = 0x8, scoped, tag = 'scoped memory for tpu_custom_call.1']
    #allocation4 [shape = 's32[2]{0}', space=sflag, size = 0x8, scoped, tag = 'scoped memory for tpu_custom_call.1']
    #allocation5 [shape = 'u8[8192]{0}', space=vmem, size = 0x2000, scoped, tag = 'output window, operand 0']
    %13 = vsyncpa [#allocation3], 0
    %s14 = scalar_lea.sflag [#allocation3], 1
    %15 = vsyncpa %s14, 0
    %16 = vsyncpa [#allocation4], 0
    %s17 = scalar_lea.sflag [#allocation4], 1
    %18 = vsyncpa %s17, 0
    loop: start=0, step=1, limit=4
    $region2: #{tpu_custom_call.1} parent=1 // loop_pre_header
      _
    $region3: #{tpu_custom_call.1} parent=1 // loop_header
      %s20 = sphi 0, %s24
      %p21 = scmp.ge.s32.totalorder %s20, 4
      %s28 = sphi 0, %s28
      %s30 = sphi 0, %s28
      %s31 = sphi 0, %s30
      %s45 = sphi 0, %s31
      %s51 = sphi 0, %s53
      %s54 = sphi 0, %s51
      %s55 = sphi 0, %s54
      %s71 = sphi 0, %s55
      %s77 = sphi 0, %s79
      %s80 = sphi 0, %s77
      %s81 = sphi 0, %s80
      %s97 = sphi 0, %s81
      %s103 = sphi 0, %s105
      %s106 = sphi 0, %s103
      %s107 = sphi 0, %s106
      %s123 = sphi 0, %s107
      %s129 = sphi 0, %s131
      %s132 = sphi 0, %s129
      %s133 = sphi 0, %s132
      %s149 = sphi 0, %s133
      %s155 = sphi 0, %s157
      %s158 = sphi 0, %s155
      %s159 = sphi 0, %s158
      %s175 = sphi 0, %s159
      %s181 = sphi 0, %s183
      %s184 = sphi 0, %s181
      %s185 = sphi 0, %s184
      %s201 = sphi 0, %s185
      %s207 = sphi 0, %s209
      %s210 = sphi 0, %s207
      %s211 = sphi 0, %s210
      %s227 = sphi 0, %s211
    $region4: #{tpu_custom_call.1} parent=1 // loop_header_branch
      %23 = sbr.rel (%p21) target = $region8
    $region5: #{tpu_custom_call.1} parent=1 // loop_body
      %s25 = ssub.s32 %s20, 1
      %s26 = ssub.s32 %s20, 2
      %s27 = sadd.s32 %s20, 1
      %s29 = sadd.s32 %s28, 1
      %p32 = scmp.eq.s32.totalorder %s20, 1
      %p33 = scmp.ne.s32.totalorder %s28, %s30
      %p34 = scmp.eq.s32.totalorder %s20, 0
      %p35 = por %p33, %p34
      %p36 = scmp.ne.s32.totalorder %s28, %s30
      %p37 = scmp.eq.s32.totalorder %s25, 1
      %p38 = por %p36, %p37
      %p39 = scmp.ne.s32.totalorder %s30, %s31
      %p40 = scmp.eq.s32.totalorder %s25, 0
      %p41 = por %p39, %p40
      %p42 = scmp.ne.s32.totalorder %s30, %s31
      %p43 = scmp.eq.s32.totalorder %s26, 1
      %p44 = por %p42, %p43
      %p46 = scmp.ne.s32.totalorder %s31, %s45
      %p47 = scmp.eq.s32.totalorder %s26, 0
      %p48 = por %p46, %p47
      %s49 = ssub.s32 %s20, %s27
      %p50 = scmp.eq.s32.totalorder %s49, 0
      %s52 = sadd.s32 %s51, 1
      %s53 = scalar_select %p50, %s51, %s52
      %p56 = pneg %p50
      %p57 = scmp.eq.s32.totalorder %s20, 1
      %p58 = por %p56, %p57
      %p59 = scmp.ne.s32.totalorder %s51, %s54
      %p60 = scmp.eq.s32.totalorder %s20, 0
      %p61 = por %p59, %p60
      %p62 = scmp.ne.s32.totalorder %s51, %s54
      %p63 = scmp.eq.s32.totalorder %s25, 1
      %p64 = por %p62, %p63
      %p65 = scmp.ne.s32.totalorder %s54, %s55
      %p66 = scmp.eq.s32.totalorder %s25, 0
      %p67 = por %p65, %p66
      %p68 = scmp.ne.s32.totalorder %s54, %s55
      %p69 = scmp.eq.s32.totalorder %s26, 1
      %p70 = por %p68, %p69
      %p72 = scmp.ne.s32.totalorder %s55, %s71
      %p73 = scmp.eq.s32.totalorder %s26, 0
      %p74 = por %p72, %p73
      %s75 = ssub.s32 %s20, %s27
      %p76 = scmp.eq.s32.totalorder %s75, 0
      %s78 = sadd.s32 %s77, 1
      %s79 = scalar_select %p76, %s77, %s78
      %p82 = pneg %p76
      %p83 = scmp.eq.s32.totalorder %s20, 1
      %p84 = por %p82, %p83
      %p85 = scmp.ne.s32.totalorder %s77, %s80
      %p86 = scmp.eq.s32.totalorder %s20, 0
      %p87 = por %p85, %p86
      %p88 = scmp.ne.s32.totalorder %s77, %s80
      %p89 = scmp.eq.s32.totalorder %s25, 1
      %p90 = por %p88, %p89
      %p91 = scmp.ne.s32.totalorder %s80, %s81
      %p92 = scmp.eq.s32.totalorder %s25, 0
      %p93 = por %p91, %p92
      %p94 = scmp.ne.s32.totalorder %s80, %s81
      %p95 = scmp.eq.s32.totalorder %s26, 1
      %p96 = por %p94, %p95
      %p98 = scmp.ne.s32.totalorder %s81, %s97
      %p99 = scmp.eq.s32.totalorder %s26, 0
      %p100 = por %p98, %p99
      %s101 = ssub.s32 %s20, %s27
      %p102 = scmp.eq.s32.totalorder %s101, 0
      %s104 = sadd.s32 %s103, 1
      %s105 = scalar_select %p102, %s103, %s104
      %p108 = pneg %p102
      %p109 = scmp.eq.s32.totalorder %s20, 1
      %p110 = por %p108, %p109
      %p111 = scmp.ne.s32.totalorder %s103, %s106
      %p112 = scmp.eq.s32.totalorder %s20, 0
      %p113 = por %p111, %p112
      %p114 = scmp.ne.s32.totalorder %s103, %s106
      %p115 = scmp.eq.s32.totalorder %s25, 1
      %p116 = por %p114, %p115
      %p117 = scmp.ne.s32.totalorder %s106, %s107
      %p118 = scmp.eq.s32.totalorder %s25, 0
      %p119 = por %p117, %p118
      %p120 = scmp.ne.s32.totalorder %s106, %s107
      %p121 = scmp.eq.s32.totalorder %s26, 1
      %p122 = por %p120, %p121
      %p124 = scmp.ne.s32.totalorder %s107, %s123
      %p125 = scmp.eq.s32.totalorder %s26, 0
      %p126 = por %p124, %p125
      %s127 = ssub.s32 %s20, %s27
      %p128 = scmp.eq.s32.totalorder %s127, 0
      %s130 = sadd.s32 %s129, 1
      %s131 = scalar_select %p128, %s129, %s130
      %p134 = pneg %p128
      %p135 = scmp.eq.s32.totalorder %s20, 1
      %p136 = por %p134, %p135
      %p137 = scmp.ne.s32.totalorder %s129, %s132
      %p138 = scmp.eq.s32.totalorder %s20, 0
      %p139 = por %p137, %p138
      %p140 = scmp.ne.s32.totalorder %s129, %s132
      %p141 = scmp.eq.s32.totalorder %s25, 1
      %p142 = por %p140, %p141
      %p143 = scmp.ne.s32.totalorder %s132, %s133
      %p144 = scmp.eq.s32.totalorder %s25, 0
      %p145 = por %p143, %p144
      %p146 = scmp.ne.s32.totalorder %s132, %s133
      %p147 = scmp.eq.s32.totalorder %s26, 1
      %p148 = por %p146, %p147
      %p150 = scmp.ne.s32.totalorder %s133, %s149
      %p151 = scmp.eq.s32.totalorder %s26, 0
      %p152 = por %p150, %p151
      %s153 = ssub.s32 %s20, %s27
      %p154 = scmp.eq.s32.totalorder %s153, 0
      %s156 = sadd.s32 %s155, 1
      %s157 = scalar_select %p154, %s155, %s156
      %p160 = pneg %p154
      %p161 = scmp.eq.s32.totalorder %s20, 1
      %p162 = por %p160, %p161
      %p163 = scmp.ne.s32.totalorder %s155, %s158
      %p164 = scmp.eq.s32.totalorder %s20, 0
      %p165 = por %p163, %p164
      %p166 = scmp.ne.s32.totalorder %s155, %s158
      %p167 = scmp.eq.s32.totalorder %s25, 1
      %p168 = por %p166, %p167
      %p169 = scmp.ne.s32.totalorder %s158, %s159
      %p170 = scmp.eq.s32.totalorder %s25, 0
      %p171 = por %p169, %p170
      %p172 = scmp.ne.s32.totalorder %s158, %s159
      %p173 = scmp.eq.s32.totalorder %s26, 1
      %p174 = por %p172, %p173
      %p176 = scmp.ne.s32.totalorder %s159, %s175
      %p177 = scmp.eq.s32.totalorder %s26, 0
      %p178 = por %p176, %p177
      %s179 = ssub.s32 %s20, %s27
      %p180 = scmp.eq.s32.totalorder %s179, 0
      %s182 = sadd.s32 %s181, 1
      %s183 = scalar_select %p180, %s181, %s182
      %p186 = pneg %p180
      %p187 = scmp.eq.s32.totalorder %s20, 1
      %p188 = por %p186, %p187
      %p189 = scmp.ne.s32.totalorder %s181, %s184
      %p190 = scmp.eq.s32.totalorder %s20, 0
      %p191 = por %p189, %p190
      %p192 = scmp.ne.s32.totalorder %s181, %s184
      %p193 = scmp.eq.s32.totalorder %s25, 1
      %p194 = por %p192, %p193
      %p195 = scmp.ne.s32.totalorder %s184, %s185
      %p196 = scmp.eq.s32.totalorder %s25, 0
      %p197 = por %p195, %p196
      %p198 = scmp.ne.s32.totalorder %s184, %s185
      %p199 = scmp.eq.s32.totalorder %s26, 1
      %p200 = por %p198, %p199
      %p202 = scmp.ne.s32.totalorder %s185, %s201
      %p203 = scmp.eq.s32.totalorder %s26, 0
      %p204 = por %p202, %p203
      %s205 = ssub.s32 %s20, %s27
      %p206 = scmp.eq.s32.totalorder %s205, 0
      %s208 = sadd.s32 %s207, 1
      %s209 = scalar_select %p206, %s207, %s208
      %p212 = pneg %p206
      %p213 = scmp.eq.s32.totalorder %s20, 1
      %p214 = por %p212, %p213
      %p215 = scmp.ne.s32.totalorder %s207, %s210
      %p216 = scmp.eq.s32.totalorder %s20, 0
      %p217 = por %p215, %p216
      %p218 = scmp.ne.s32.totalorder %s207, %s210
      %p219 = scmp.eq.s32.totalorder %s25, 1
      %p220 = por %p218, %p219
      %p221 = scmp.ne.s32.totalorder %s210, %s211
      %p222 = scmp.eq.s32.totalorder %s25, 0
      %p223 = por %p221, %p222
      %p224 = scmp.ne.s32.totalorder %s210, %s211
      %p225 = scmp.eq.s32.totalorder %s26, 1
      %p226 = por %p224, %p225
      %p228 = scmp.ne.s32.totalorder %s211, %s227
      %p229 = scmp.eq.s32.totalorder %s26, 0
      %p230 = por %p228, %p229
      %p231 = scmp.le.s32.totalorder 1, %s20
      %p232 = scmp.lt.s32.totalorder %s20, 3
      %p233 = pnand %p231, %p232
      %p234 = pneg %p233
      // Predicated region
      $region9: #{tpu_custom_call.1} parent=5 // pred_check
        _
      $region10: #{tpu_custom_call.1} parent=5 // pred_check_branch
        %236 = sbr.rel (%p233) target = $region12
      $region11: #{tpu_custom_call.1} parent=5 // pred_region
        %s237 = ssub.s32 %s20, 1
        // Predicated region
        $region13: #{tpu_custom_call.1} parent=11 // pred_check
          %p238 = pneg %p41
        $region14: #{tpu_custom_call.1} parent=11 // pred_check_branch
          %240 = sbr.rel (%p238) target = $region16
        $region15: #{tpu_custom_call.1} parent=11 // pred_region
          _
        $region16: #{tpu_custom_call.1} parent=11 // pred_fallthru
          _
      $region12: #{tpu_custom_call.1} parent=5 // pred_fallthru
        _
      %p241 = scmp.lt.s32.totalorder %s20, 2
      // Predicated region
      $region17: #{tpu_custom_call.1} parent=5 // pred_check
        %p242 = pneg %p241
      $region18: #{tpu_custom_call.1} parent=5 // pred_check_branch
        %244 = sbr.rel (%p242) target = $region20
      $region19: #{tpu_custom_call.1} parent=5 // pred_region
        // Predicated region
        $region21: #{tpu_custom_call.1} parent=19 // pred_check
          %p245 = pneg %p61
        $region22: #{tpu_custom_call.1} parent=19 // pred_check_branch
          %247 = sbr.rel (%p245) target = $region24
        $region23: #{tpu_custom_call.1} parent=19 // pred_region
          %p248 = scmp.lt.s32.totalorder %s20, 1
          %s249 = scalar_select %p248, %s20, 1
          %s250 = smul.addr %s249, 8
          %s251 = scalar_lea.vmem %s1, %s250
        $region24: #{tpu_custom_call.1} parent=19 // pred_fallthru
          _
        // Predicated region
        $region25: #{tpu_custom_call.1} parent=19 // pred_check
          %p252 = pneg %p87
        $region26: #{tpu_custom_call.1} parent=19 // pred_check_branch
          %254 = sbr.rel (%p252) target = $region28
        $region27: #{tpu_custom_call.1} parent=19 // pred_region
          %p255 = scmp.lt.s32.totalorder %s20, 1
          %s256 = scalar_select %p255, %s20, 1
          %s257 = smul.addr %s256, 4
          %s258 = scalar_lea.vmem %s2, %s257
        $region28: #{tpu_custom_call.1} parent=19 // pred_fallthru
          _
        // Predicated region
        $region29: #{tpu_custom_call.1} parent=19 // pred_check
          %p259 = pneg %p113
        $region30: #{tpu_custom_call.1} parent=19 // pred_check_branch
          %261 = sbr.rel (%p259) target = $region32
        $region31: #{tpu_custom_call.1} parent=19 // pred_region
          %p262 = scmp.lt.s32.totalorder %s20, 1
          %s263 = scalar_select %p262, %s20, 1
          %s264 = smul.addr %s263, 4
          %s265 = scalar_lea.vmem %s3, %s264
        $region32: #{tpu_custom_call.1} parent=19 // pred_fallthru
          _
        // Predicated region
        $region33: #{tpu_custom_call.1} parent=19 // pred_check
          %p266 = pneg %p139
        $region34: #{tpu_custom_call.1} parent=19 // pred_check_branch
          %268 = sbr.rel (%p266) target = $region36
        $region35: #{tpu_custom_call.1} parent=19 // pred_region
          %s269 = sand.u32 %s129, 1
          %s270 = scalar_lea.sflag [#allocation3], %s269
          %s271 = sand.u32 %s129, 1
          %s272 = smul.addr %s271, 4
          %s273 = scalar_lea.vmem [#allocation2], %s272
          %s275 = ssub.s32 64, 64
          %276 = vsyncadd %s270, %s275
          %s277 = smul.addr %s20, 64
          %s278 = scalar_lea.hbm %s4, %s277
          %s280 = sshll.u32 %s273, 4
          %s281 = int_to_ptr.vmem [resolvable:$true] %s280
          %283 = dma.hbm_to_vmem [thread:$0]  %s278, 64, %s281, %s270
        $region36: #{tpu_custom_call.1} parent=19 // pred_fallthru
          _
        // Predicated region
        $region37: #{tpu_custom_call.1} parent=19 // pred_check
          %p284 = pneg %p165
        $region38: #{tpu_custom_call.1} parent=19 // pred_check_branch
          %286 = sbr.rel (%p284) target = $region40
        $region39: #{tpu_custom_call.1} parent=19 // pred_region
          %p287 = scmp.lt.s32.totalorder %s20, 1
          %s288 = scalar_select %p287, %s20, 1
          %s289 = smul.addr %s288, 4
          %s290 = scalar_lea.vmem %s5, %s289
        $region40: #{tpu_custom_call.1} parent=19 // pred_fallthru
          _
      $region20: #{tpu_custom_call.1} parent=5 // pred_fallthru
        _
      %p291 = scmp.le.s32.totalorder 1, %s20
      %p292 = scmp.lt.s32.totalorder %s20, 3
      %p293 = pnand %p291, %p292
      %p294 = pneg %p293
      // Predicated region
      $region41: #{tpu_custom_call.1} parent=5 // pred_check
        _
      $region42: #{tpu_custom_call.1} parent=5 // pred_check_branch
        %296 = sbr.rel (%p293) target = $region44
      $region43: #{tpu_custom_call.1} parent=5 // pred_region
        %s297 = ssub.s32 %s20, 1
        %s298 = sand.u32 %s132, 1
        %s299 = scalar_lea.sflag [#allocation3], %s298
        %s300 = sand.u32 %s132, 1
        %s301 = smul.addr %s300, 4
        %s302 = scalar_lea.vmem [#allocation2], %s301
        // Predicated region
        $region45: #{tpu_custom_call.1} parent=43 // pred_check
          %p303 = pneg %p145
        $region46: #{tpu_custom_call.1} parent=43 // pred_check_branch
          %305 = sbr.rel (%p303) target = $region48
        $region47: #{tpu_custom_call.1} parent=43 // pred_region
          %306 = dma.done %s299, 64
        $region48: #{tpu_custom_call.1} parent=43 // pred_fallthru
          _
        %p307 = pneg %p41
        %p308 = pneg %p38
        %p309 = scmp.lt.s32.totalorder %s25, 1
        %s310 = scalar_select %p309, %s25, 1
        %s311 = smul.addr %s310, 8
        %s312 = scalar_lea.vmem %s1, %s311
        %p313 = pneg %p67
        %p314 = pneg %p64
        %p315 = scmp.lt.s32.totalorder %s25, 1
        %s316 = scalar_select %p315, %s25, 1
        %s317 = smul.addr %s316, 4
        %s318 = scalar_lea.vmem %s2, %s317
        %p319 = pneg %p93
        %p320 = pneg %p90
        %p321 = scmp.lt.s32.totalorder %s25, 1
        %s322 = scalar_select %p321, %s25, 1
        %s323 = smul.addr %s322, 4
        %s324 = scalar_lea.vmem %s3, %s323
        %p325 = pneg %p119
        %p326 = pneg %p116
        %s327 = sand.u32 %s132, 1
        %s328 = scalar_lea.sflag [#allocation3], %s327
        %s329 = sand.u32 %s132, 1
        %s330 = smul.addr %s329, 4
        %s331 = scalar_lea.vmem [#allocation2], %s330
        %p332 = pneg %p145
        %p333 = pneg %p142
        %p334 = scmp.lt.s32.totalorder %s25, 1
        %s335 = scalar_select %p334, %s25, 1
        %s336 = smul.addr %s335, 4
        %s337 = scalar_lea.vmem %s5, %s336
        %p338 = pneg %p171
        %p339 = pneg %p168
        %p340 = pneg %p197
        %p341 = pneg %p194
        %s342 = sand.u32 %s184, 1
        %s343 = scalar_lea.sflag [#allocation4], %s342
        %s344 = sand.u32 %s184, 1
        %s345 = smul.addr %s344, 8
        %s346 = scalar_lea.vmem [#allocation5], %s345
        %p347 = pneg %p223
        %p348 = pneg %p220
        %p349 = scmp.lt.s32.totalorder %s25, 1
        %s350 = scalar_select %p349, %s25, 1
        %s351 = smul.addr %s350, 8
        %s352 = scalar_lea.vmem %s7, %s351
        %p353 = scmp.lt.s32.totalorder %s25, 1
        %s354 = scalar_select %p353, %s25, 1
        %s355 = smul.addr %s354, 8
        %s356 = scalar_lea.vmem %s1, %s355
        %p357 = scmp.lt.s32.totalorder %s25, 1
        %s358 = scalar_select %p357, %s25, 1
        %s359 = smul.addr %s358, 4
        %s360 = scalar_lea.vmem %s2, %s359
        %p361 = scmp.lt.s32.totalorder %s25, 1
        %s362 = scalar_select %p361, %s25, 1
        %s363 = smul.addr %s362, 4
        %s364 = scalar_lea.vmem %s3, %s363
        %p365 = scmp.lt.s32.totalorder %s25, 1
        %s366 = scalar_select %p365, %s25, 1
        %s367 = smul.addr %s366, 4
        %s368 = scalar_lea.vmem %s5, %s367
        %p369 = scmp.lt.s32.totalorder %s25, 1
        %s370 = scalar_select %p369, %s25, 1
        %s371 = smul.addr %s370, 8
        %s372 = scalar_lea.vmem %s7, %s371
        %v374 = vld [vmem:[%s360] sm:$0xf]
        %v375 = vld [vmem:[%s364] sm:$0xf]
        %v376 = vld [vmem:[%s0] sm:$0xf]
        %v377 = vld [vmem:[%s0 + $0x4] sm:$0xf]
        %v378 = vld [vmem:[%s0 + $0x8] sm:$0xf]
        %v379 = vld [vmem:[%s0 + $0xc] sm:$0xf]
        %v384 = vunpack.c.l.b16 %v376
        %v385 = vunpack.c.l.b16 %v377
        %v386 = vunpack.c.l.b16 %v378
        %v387 = vunpack.c.l.b16 %v379
        %v388 = vpack.c.b16 %v385, %v384
        %v389 = vpack.c.b16 %v387, %v386
        %vm390 = vcmask 261120
        %v392 = vsel %vm390, %v374, 0
        %v395 = vsel %vm390, %v388, 0
        %v398 = vsel %vm390, %v389, 0
        %400 = vmatprep.subr.bf16.mxu0 0
        %401 = vmatpush1.bf16.xpose.msra.mxu0 0
        %402 = vmatprep.subr.bf16.mxu0 0
        %403 = vmatpush1.bf16.xpose.msra.mxu0 0
        %404 = vmatprep.subr.bf16.mxu0 0
        %405 = vmatpush1.bf16.xpose.msra.mxu0 0
        %406 = vmatprep.subr.bf16.mxu0 0
        %407 = vmatpush1.bf16.xpose.msra.mxu0 0
        %408 = vmatprep.subr.bf16.mxu0 0
        %409 = vmatpush1.bf16.xpose.msra.mxu0 0
        %410 = vmatprep.subr.bf16.mxu0 0
        %411 = vmatpush1.bf16.xpose.msra.mxu0 0
        %412 = vmatprep.subr.bf16.mxu0 0
        %413 = vmatpush1.bf16.xpose.msra.mxu0 %v398
        %414 = vmatprep.subr.bf16.mxu0 0
        %415 = vmatpush1.bf16.xpose.msra.mxu0 %v395
        %416 = vmatprep.subr.bf16.mxu0 0
        %417 = vmatpush2.bf16.xpose.msra.mxu0 0
        %418 = vmatprep.subr.bf16.mxu0 0
        %419 = vmatpush2.bf16.xpose.msra.mxu0 0
        %420 = vmatprep.subr.bf16.mxu0 0
        %421 = vmatpush2.bf16.xpose.msra.mxu0 0
        %422 = vmatprep.subr.bf16.mxu0 0
        %423 = vmatpush2.bf16.xpose.msra.mxu0 0
        %424 = vmatprep.subr.bf16.mxu0 0
        %425 = vmatpush2.bf16.xpose.msra.mxu0 0
        %426 = vmatprep.subr.bf16.mxu0 0
        %427 = vmatpush2.bf16.xpose.msra.mxu0 0
        %428 = vmatprep.subr.bf16.mxu0 0
        %429 = vmatpush2.bf16.xpose.msra.mxu0 0
        %430 = vmatprep.subr.bf16.mxu0 0
        %431 = vmatpush2.bf16.xpose.msra.mxu0 0
        %432 = vmatprep.mubr.bf16.mxu0 0
        %433 = vmatmul.mubr.bf16.gmra.mxu0 %v392
        %v434 = vpop.f32.mrf.mxu0
        %v435 = vadd.f32 0.0, %v434
        %v436 = vpop.f32.mrf.mxu0
        %v437 = vpop.f32.mrf.mxu0
        %v438 = vpop.f32.mrf.mxu0
        %439 = vdwg.mxu0
        %v440 = vmul.f32 %v435, 0.17677669
        %v441 = vpack.c.bf16 %v440, %v440
        %v443 = vsel %vm390, %v441, 0
        %v446 = vsel %vm390, %v375, 0
        %448 = vmatprep.subr.bf16.mxu0 0
        %449 = vmatpush1.bf16.xpose.msra.mxu0 0
        %450 = vmatprep.subr.bf16.mxu0 0
        %451 = vmatpush1.bf16.xpose.msra.mxu0 0
        %452 = vmatprep.subr.bf16.mxu0 0
        %453 = vmatpush1.bf16.xpose.msra.mxu0 0
        %454 = vmatprep.subr.bf16.mxu0 0
        %455 = vmatpush1.bf16.xpose.msra.mxu0 0
        %456 = vmatprep.subr.bf16.mxu0 0
        %457 = vmatpush1.bf16.xpose.msra.mxu0 0
        %458 = vmatprep.subr.bf16.mxu0 0
        %459 = vmatpush1.bf16.xpose.msra.mxu0 0
        %460 = vmatprep.subr.bf16.mxu0 0
        %461 = vmatpush1.bf16.xpose.msra.mxu0 0
        %462 = vmatprep.subr.bf16.mxu0 0
        %463 = vmatpush1.bf16.xpose.msra.mxu0 %v446
        %464 = vmatprep.subr.bf16.mxu0 0
        %465 = vmatpush2.bf16.xpose.msra.mxu0 0
        %466 = vmatprep.subr.bf16.mxu0 0
        %467 = vmatpush2.bf16.xpose.msra.mxu0 0
        %468 = vmatprep.subr.bf16.mxu0 0
        %469 = vmatpush2.bf16.xpose.msra.mxu0 0
        %470 = vmatprep.subr.bf16.mxu0 0
        %471 = vmatpush2.bf16.xpose.msra.mxu0 0
        %472 = vmatprep.subr.bf16.mxu0 0
        %473 = vmatpush2.bf16.xpose.msra.mxu0 0
        %474 = vmatprep.subr.bf16.mxu0 0
        %475 = vmatpush2.bf16.xpose.msra.mxu0 0
        %476 = vmatprep.subr.bf16.mxu0 0
        %477 = vmatpush2.bf16.xpose.msra.mxu0 0
        %478 = vmatprep.subr.bf16.mxu0 0
        %479 = vmatpush2.bf16.xpose.msra.mxu0 0
        %480 = vmatprep.mubr.bf16.mxu0 0
        %481 = vmatmul.mubr.bf16.gmra.mxu0 %v443
        %v482 = vpop.f32.mrf.mxu0
        %v483 = vadd.f32 0.0, %v482
        %v484 = vpop.f32.mrf.mxu0
        %v485 = vpop.f32.mrf.mxu0
        %v486 = vpop.f32.mrf.mxu0
        %487 = vdwg.mxu0
        %v488 = vld [vmem:[%s356] sm:$0xff]
        %v489 = vlaneseq
        %v490 = vand.u32 %v489, 127
        %491 = vset.pattern.permute.xlu0 0
        %492 = vperm.xlu0 %491, %v488
        %v493 = vpop.permute.xlu0 %492
        %vm494 = vcmp.lt.s32.totalorder %v490, %v493
        %v495 = vsel %vm494, %v483, -1000000.0
        %vm496 = vcmask 64512
        %v497 = vsel %vm496, %v495, -inf
        %498 = vmax.xlane.f32.xlu0 %v497
        %v499 = vpop.xlane.xlu0 %498
        %v500 = vsub.f32 %v495, %v499
        %v501 = vmul.f32 %v500, 1.442695
        %v502 = vpow.pop %v501
        %v503 = vsel %vm496, %v502, 0.0
        %504 = vadd.xlane.f32.xlu0 %v503
        %v505 = vpop.xlane.xlu0 %504
        %v506 = vrcp.pop %v505
        %v507 = vmul.f32 %v502, %v506
        %v508 = vpack.c.bf16 %v507, %v507
        %v509 = vld [vmem:[%s302] sm:$0xf]
        %v511 = vsel %vm496, %v508, 0
        %vm513 = vcmask 1043456
        %v515 = vsel %vm513, %v509, 0
        %517 = vmatprep.subr.bf16.mxu0 0
        %518 = vmatpush1.bf16.msra.mxu0 0
        %519 = vmatprep.subr.bf16.mxu0 0
        %520 = vmatpush1.bf16.msra.mxu0 0
        %521 = vmatprep.subr.bf16.mxu0 0
        %522 = vmatpush1.bf16.msra.mxu0 0
        %523 = vmatprep.subr.bf16.mxu0 0
        %524 = vmatpush1.bf16.msra.mxu0 0
        %525 = vmatprep.subr.bf16.mxu0 0
        %526 = vmatpush1.bf16.msra.mxu0 0
        %527 = vmatprep.subr.bf16.mxu0 0
        %528 = vmatpush1.bf16.msra.mxu0 0
        %529 = vmatprep.subr.bf16.mxu0 0
        %530 = vmatpush1.bf16.msra.mxu0 0
        %531 = vmatprep.subr.bf16.mxu0 0
        %532 = vmatpush1.bf16.msra.mxu0 %v515
        %533 = vmatprep.subr.bf16.mxu0 0
        %534 = vmatpush2.bf16.msra.mxu0 0
        %535 = vmatprep.subr.bf16.mxu0 0
        %536 = vmatpush2.bf16.msra.mxu0 0
        %537 = vmatprep.subr.bf16.mxu0 0
        %538 = vmatpush2.bf16.msra.mxu0 0
        %539 = vmatprep.subr.bf16.mxu0 0
        %540 = vmatpush2.bf16.msra.mxu0 0
        %541 = vmatprep.subr.bf16.mxu0 0
        %542 = vmatpush2.bf16.msra.mxu0 0
        %543 = vmatprep.subr.bf16.mxu0 0
        %544 = vmatpush2.bf16.msra.mxu0 0
        %545 = vmatprep.subr.bf16.mxu0 0
        %546 = vmatpush2.bf16.msra.mxu0 0
        %547 = vmatprep.subr.bf16.mxu0 0
        %548 = vmatpush2.bf16.msra.mxu0 0
        %549 = vmatprep.mubr.bf16.mxu0 0
        %550 = vmatmul.mubr.bf16.gmra.mxu0 %v511
        %v551 = vpop.f32.mrf.mxu0
        %v552 = vadd.f32 0.0, %v551
        %v553 = vpop.f32.mrf.mxu0
        %v554 = vpop.f32.mrf.mxu0
        %v555 = vpop.f32.mrf.mxu0
        %556 = vdwg.mxu0
        %vm557 = vcmask 130048
        %558 = vst.msk [vmem:[%s346] sm:$0xff] %vm557, %v552
        %v559 = vld [vmem:[%s368] sm:$0xf]
        %v561 = vsel %vm513, %v559, 0
        %563 = vmatprep.subr.bf16.mxu0 0
        %564 = vmatpush1.bf16.msra.mxu0 0
        %565 = vmatprep.subr.bf16.mxu0 0
        %566 = vmatpush1.bf16.msra.mxu0 0
        %567 = vmatprep.subr.bf16.mxu0 0
        %568 = vmatpush1.bf16.msra.mxu0 0
        %569 = vmatprep.subr.bf16.mxu0 0
        %570 = vmatpush1.bf16.msra.mxu0 0
        %571 = vmatprep.subr.bf16.mxu0 0
        %572 = vmatpush1.bf16.msra.mxu0 0
        %573 = vmatprep.subr.bf16.mxu0 0
        %574 = vmatpush1.bf16.msra.mxu0 0
        %575 = vmatprep.subr.bf16.mxu0 0
        %576 = vmatpush1.bf16.msra.mxu0 0
        %577 = vmatprep.subr.bf16.mxu0 0
        %578 = vmatpush1.bf16.msra.mxu0 %v561
        %579 = vmatprep.subr.bf16.mxu0 0
        %580 = vmatpush2.bf16.msra.mxu0 0
        %581 = vmatprep.subr.bf16.mxu0 0
        %582 = vmatpush2.bf16.msra.mxu0 0
        %583 = vmatprep.subr.bf16.mxu0 0
        %584 = vmatpush2.bf16.msra.mxu0 0
        %585 = vmatprep.subr.bf16.mxu0 0
        %586 = vmatpush2.bf16.msra.mxu0 0
        %587 = vmatprep.subr.bf16.mxu0 0
        %588 = vmatpush2.bf16.msra.mxu0 0
        %589 = vmatprep.subr.bf16.mxu0 0
        %590 = vmatpush2.bf16.msra.mxu0 0
        %591 = vmatprep.subr.bf16.mxu0 0
        %592 = vmatpush2.bf16.msra.mxu0 0
        %593 = vmatprep.subr.bf16.mxu0 0
        %594 = vmatpush2.bf16.msra.mxu0 0
        %595 = vmatprep.mubr.bf16.mxu0 0
        %596 = vmatmul.mubr.bf16.gmra.mxu0 %v511
        %v597 = vpop.f32.mrf.mxu0
        %v598 = vadd.f32 0.0, %v597
        %v599 = vpop.f32.mrf.mxu0
        %v600 = vpop.f32.mrf.mxu0
        %v601 = vpop.f32.mrf.mxu0
        %602 = vdwg.mxu0
        %vm603 = vcmask 31744
        %604 = vst.msk [vmem:[%s372] sm:$0xff] %vm603, %v598
        %s605 = sand.u32 %s184, 1
        %s606 = scalar_lea.sflag [#allocation4], %s605
        %s607 = sand.u32 %s184, 1
        %s608 = smul.addr %s607, 8
        %s609 = scalar_lea.vmem [#allocation5], %s608
        %p610 = scmp.lt.s32.totalorder %s25, 1
        %s611 = scalar_select %p610, %s25, 1
        %s612 = smul.addr %s611, 8
        %s613 = scalar_lea.vmem %s7, %s612
        // Predicated region
        $region49: #{tpu_custom_call.1} parent=43 // pred_check
          %p614 = pneg %p194
        $region50: #{tpu_custom_call.1} parent=43 // pred_check_branch
          %616 = sbr.rel (%p614) target = $region52
        $region51: #{tpu_custom_call.1} parent=43 // pred_region
          %s618 = ssub.s32 128, 128
          %619 = vsyncadd %s606, %s618
          %s620 = smul.addr %s25, 128
          %s621 = scalar_lea.hbm %s6, %s620
          %s623 = sshll.u32 %s609, 4
          %s624 = int_to_ptr.vmem [resolvable:$true] %s623
          %626 = dma.vmem_to_hbm [thread:$0]  %s624, 128, %s621, %s606
        $region52: #{tpu_custom_call.1} parent=43 // pred_fallthru
          _
        // Predicated region
        $region53: #{tpu_custom_call.1} parent=43 // pred_check
          %p627 = pneg %p220
        $region54: #{tpu_custom_call.1} parent=43 // pred_check_branch
          %629 = sbr.rel (%p627) target = $region56
        $region55: #{tpu_custom_call.1} parent=43 // pred_region
          _
        $region56: #{tpu_custom_call.1} parent=43 // pred_fallthru
          _
      $region44: #{tpu_custom_call.1} parent=5 // pred_fallthru
        _
      %p630 = scmp.le.s32.totalorder 2, %s20
      // Predicated region
      $region57: #{tpu_custom_call.1} parent=5 // pred_check
        %p631 = pneg %p630
      $region58: #{tpu_custom_call.1} parent=5 // pred_check_branch
        %633 = sbr.rel (%p631) target = $region60
      $region59: #{tpu_custom_call.1} parent=5 // pred_region
        %s634 = ssub.s32 %s20, 2
        // Predicated region
        $region61: #{tpu_custom_call.1} parent=59 // pred_check
          %p635 = pneg %p200
        $region62: #{tpu_custom_call.1} parent=59 // pred_check_branch
          %637 = sbr.rel (%p635) target = $region64
        $region63: #{tpu_custom_call.1} parent=59 // pred_region
          %s638 = sand.u32 %s185, 1
          %s639 = scalar_lea.sflag [#allocation4], %s638
          %s640 = sand.u32 %s185, 1
          %s641 = smul.addr %s640, 8
          %s642 = scalar_lea.vmem [#allocation5], %s641
          %643 = dma.done %s639, 128
        $region64: #{tpu_custom_call.1} parent=59 // pred_fallthru
          _
        // Predicated region
        $region65: #{tpu_custom_call.1} parent=59 // pred_check
          %p644 = pneg %p226
        $region66: #{tpu_custom_call.1} parent=59 // pred_check_branch
          %646 = sbr.rel (%p644) target = $region68
        $region67: #{tpu_custom_call.1} parent=59 // pred_region
          %p647 = scmp.lt.s32.totalorder %s26, 1
          %s648 = scalar_select %p647, %s26, 1
          %s649 = smul.addr %s648, 8
          %s650 = scalar_lea.vmem %s7, %s649
        $region68: #{tpu_custom_call.1} parent=59 // pred_fallthru
          _
      $region60: #{tpu_custom_call.1} parent=5 // pred_fallthru
        _
    $region6: #{tpu_custom_call.1} parent=1 // loop_footer
      %s24 = sadd.s32 1, %s20
    $region7: #{tpu_custom_call.1} parent=1 // loop_footer_branch
      %19 = sbr.rel target = $region3
    $region8: #{tpu_custom_call.1} parent=1 // loop_exit
      _
    %651 = vsyncpa [#allocation3], 1
    %s652 = scalar_lea.sflag [#allocation3], 1
    %653 = vsyncpa %s652, 1
    %654 = vsyncpa [#allocation4], 1
    %s655 = scalar_lea.sflag [#allocation4], 1
    %656 = vsyncpa %s655, 1

</llo_original>
